<compile_context>
chip_gen: v7x
topology: tpu7x:2x2x1
jax: 0.10.0
libtpu: 0.0.40
codegen_flags: <defaults>
</compile_context>

<pallas_src>
import functools
import math

import jax
import jax.numpy as jnp
from jax.experimental import pallas as pl
from jax.experimental.pallas import tpu as pltpu

BN_EPS = 1e-5
LANE = 128
# 128 calls/step * 8 rows => activation slabs of ~0.5-2 MiB; together with the
# double-buffered x/out blocks and the resident weights this stays well inside
# the smallest scoped-VMEM default (16 MiB on v5e) and v7x's 64 MiB physical.
MAX_CALLS_PER_STEP = 128


def actor_kernel(x_ref, w1_ref, g_ref, be_ref, w2_ref, b2_ref, w3_ref, b3_ref,
                 o_ref, *, cps, batch, use_bf16):
    """One grid step: `cps` independent forward calls packed into one slab."""
    x = x_ref[...]                                                   # (R, S)

    # fc1 (bias omitted: exactly cancelled by training-mode BN mean subtraction).
    h1 = jnp.dot(x, w1_ref[...], preferred_element_type=jnp.float32)  # (R, H1)

    # Per-call BatchNorm1d (training mode), folded into one scale/shift.
    # The (cps, batch, H1) reshape is tile-aligned when batch == 8 (one sublane
    # group per call) => a free view, not a VMEM copy.
    h1c = h1.reshape(cps, batch, h1.shape[-1])
    inv_n = 1.0 / batch
    mean = jnp.sum(h1c, axis=1, keepdims=True) * inv_n               # (cps,1,H1)
    msq = jnp.sum(h1c * h1c, axis=1, keepdims=True) * inv_n          # (cps,1,H1)
    var = msq - mean * mean
    scale = g_ref[...] * jax.lax.rsqrt(var + BN_EPS)                 # (cps,1,H1)
    shift = be_ref[...] - mean * scale                               # (cps,1,H1)
    h1r = jnp.maximum(h1c * scale + shift, 0.0).reshape(h1.shape)    # (R, H1)

    # fc2 + relu, fc3 + tanh.  In the MXU-bound packed regime the dot inputs
    # are bf16 (weights pre-cast in the wrapper) with f32 accumulation.
    if use_bf16:
        h1r = h1r.astype(jnp.bfloat16)
    h2 = jnp.maximum(
        jnp.dot(h1r, w2_ref[...], preferred_element_type=jnp.float32)
        + b2_ref[...], 0.0)
    if use_bf16:
        h2 = h2.astype(jnp.bfloat16)
    # W3/b3 are zero-padded to a lane-dense last dim; pad columns give
    # tanh(0) = 0 and are sliced off in the wrapper.
    o_ref[...] = jnp.tanh(
        jnp.dot(h2, w3_ref[...], preferred_element_type=jnp.float32)
        + b3_ref[...])


def _pad_lane(a, target):
    pad = target - a.shape[-1]
    if pad == 0:
        return a
    return jnp.pad(a, [(0, 0)] * (a.ndim - 1) + [(0, pad)])


def actor_forward_batched(x, params, *, calls_per_step=None, use_bf16=None):
    """Run `num_calls` independent forward passes in one pallas_call.

    x: (num_calls, batch, state_size). BatchNorm statistics are computed per
    call (per leading index), identical to invoking the module once per call.
    Calls are packed `calls_per_step` at a time per grid step.
    """
    w1, b1, gamma, beta, w2, b2, w3, b3 = params
    del b1  # exactly cancelled by the training-mode BN mean subtraction
    num_calls, batch, state = x.shape
    action = w3.shape[1]
    a_pad = -(-action // LANE) * LANE            # lane-dense output width

    # Calls per grid step: sublane-friendly (cps*batch % 8 == 0), capped for
    # VMEM, and >= 2 grid steps whenever possible so v7x can split the
    # "parallel" axis across its 2 TensorCores.
    sub = 8 // math.gcd(batch, 8)
    if calls_per_step is None:
        cps = min(num_calls, MAX_CALLS_PER_STEP)
        if num_calls >= 2 * sub:
            cps = min(cps, pl.cdiv(num_calls, 2))
    else:
        cps = calls_per_step
    cps = max(sub, -(-cps // sub) * sub)

    grid_calls = pl.cdiv(num_calls, cps)
    padded_calls = grid_calls * cps
    rows_per_step = cps * batch

    if use_bf16 is None:
        # bf16 MXU inputs only pay off once the matmuls are MXU-bound.
        use_bf16 = rows_per_step >= 256

    # Flatten (and zero-pad the call axis) in the wrapper so the only
    # in-kernel reshape is the tile-aligned per-call BN one.
    x2 = x.reshape(num_calls * batch, state)
    if padded_calls != num_calls:
        x2 = jnp.pad(x2, ((0, (padded_calls - num_calls) * batch), (0, 0)))

    w3p = _pad_lane(w3, a_pad)
    b3p = _pad_lane(b3, a_pad)
    mm_dtype = jnp.bfloat16 if use_bf16 else jnp.float32
    w2c = w2.astype(mm_dtype)
    w3c = w3p.astype(mm_dtype)

    kernel = functools.partial(actor_kernel, cps=cps, batch=batch,
                               use_bf16=use_bf16)
    out_shape = jax.ShapeDtypeStruct((padded_calls * batch, a_pad), jnp.float32)
    args = (x2, w1, gamma, beta, w2c, b2, w3c, b3p)

    if grid_calls == 1:
        # Latency path: single step -> grid-less call with whole-array refs;
        # skips pipeline prologue/epilogue and per-step bookkeeping.
        out = pl.pallas_call(kernel, out_shape=out_shape)(*args)
    else:
        # Constant index_maps: the Pallas TPU pipeliner only re-issues an
        # input DMA when its block index changes, so the weights are fetched
        # once and stay resident in VMEM across grid steps.
        const = lambda a: pl.BlockSpec(a.shape, lambda i: (0,) * a.ndim)
        out = pl.pallas_call(
            kernel,
            out_shape=out_shape,
            grid=(grid_calls,),
            in_specs=[
                pl.BlockSpec((rows_per_step, state), lambda i: (i, 0)),
                const(w1), const(gamma), const(beta),
                const(w2c), const(b2), const(w3c), const(b3p),
            ],
            out_specs=pl.BlockSpec((rows_per_step, a_pad), lambda i: (i, 0)),
            compiler_params=pltpu.CompilerParams(
                dimension_semantics=("parallel",),
                vmem_limit_bytes=32 * 1024 * 1024),
        )(*args)

    out = out.reshape(padded_calls, batch, a_pad)
    return out[:num_calls, :, :action]


def actor_forward(x, params):
    """Single forward call, x: (batch, state_size)."""
    return actor_forward_batched(x[None], params)[0]


def init_params(key, state_size, action_size, h1=128, h2=256):
    """Deterministic init mimicking nn.Linear default (uniform +/- 1/sqrt(fan_in))."""
    ks = jax.random.split(key, 6)

    def linear(kw, kb, fan_in, fan_out):
        bound = 1.0 / math.sqrt(fan_in)
        w = jax.random.uniform(kw, (fan_in, fan_out), jnp.float32, -bound, bound)
        b = jax.random.uniform(kb, (1, fan_out), jnp.float32, -bound, bound)
        return w, b

    w1, b1 = linear(ks[0], ks[1], state_size, h1)
    w2, b2 = linear(ks[2], ks[3], h1, h2)
    w3, b3 = linear(ks[4], ks[5], h2, action_size)
    gamma = jnp.ones((1, h1), jnp.float32)   # BatchNorm1d weight init
    beta = jnp.zeros((1, h1), jnp.float32)   # BatchNorm1d bias init
    return (w1, b1, gamma, beta, w2, b2, w3, b3)


def actor_reference(x, params):
    """Plain-JAX reference matching the PyTorch module exactly (incl. fc1 bias)."""
    w1, b1, gamma, beta, w2, b2, w3, b3 = params
    h1 = x @ w1 + b1
    mean = jnp.mean(h1, axis=0, keepdims=True)
    var = jnp.mean((h1 - mean) ** 2, axis=0, keepdims=True)
    h1 = (h1 - mean) / jnp.sqrt(var + BN_EPS) * gamma + beta
    h1 = jnp.maximum(h1, 0.0)
    h2 = jnp.maximum(h1 @ w2 + b2, 0.0)
    return jnp.tanh(h2 @ w3 + b3)


if __name__ == "__main__":
    key = jax.random.PRNGKey(0)
    k_x, k_p, k_x3, k_x4 = jax.random.split(key, 4)

    batch, state_size, action_size = 8, 16, 8
    params = init_params(k_p, state_size, action_size)

    # 1) Single-call latency path (grid-less pallas_call, f32).
    x = jax.random.normal(k_x, (batch, state_size), jnp.float32)
    out = jax.block_until_ready(actor_forward(x, params))
    ref = actor_reference(x, params)
    assert out.shape == (batch, action_size)
    assert jnp.allclose(out, ref, atol=2e-4, rtol=2e-4), "single-call mismatch"

    # 2) Small batched path (2 calls/step, 2 grid steps, f32).
    num_calls = 4
    x3 = jax.random.normal(k_x3, (num_calls, batch, state_size), jnp.float32)
    out3 = jax.block_until_ready(actor_forward_batched(x3, params))
    ref3 = jax.vmap(lambda xi: actor_reference(xi, params))(x3)
    assert out3.shape == (num_calls, batch, action_size)
    assert jnp.allclose(out3, ref3, atol=2e-4, rtol=2e-4), "batched mismatch"

    # 3) Packed path: 64 calls -> 32 calls/step (256-row MXU slabs), 2 steps.
    num_calls = 64
    x4 = jax.random.normal(k_x4, (num_calls, batch, state_size), jnp.float32)
    ref4 = jax.vmap(lambda xi: actor_reference(xi, params))(x4)
    out4_f32 = jax.block_until_ready(
        actor_forward_batched(x4, params, use_bf16=False))
    assert out4_f32.shape == (num_calls, batch, action_size)
    assert jnp.allclose(out4_f32, ref4, atol=2e-4, rtol=2e-4), "packed f32 mismatch"
    # bf16 MXU inputs auto-enable at this slab size; f32 accumulation.
    out4_bf16 = jax.block_until_ready(actor_forward_batched(x4, params))
    assert jnp.allclose(out4_bf16, ref4, atol=7.5e-2, rtol=7.5e-2), \
        "packed bf16 mismatch"

    print("KERNEL_OK")
</pallas_src>

<mosaic_0001>
module attributes {stable_mosaic.version = 11 : i64} {
  func.func @actor_kernel(%arg0: memref<8x16xf32, #tpu.memory_space<vmem>>, %arg1: memref<16x128xf32, #tpu.memory_space<vmem>>, %arg2: memref<1x128xf32, #tpu.memory_space<vmem>>, %arg3: memref<1x128xf32, #tpu.memory_space<vmem>>, %arg4: memref<128x256xf32, #tpu.memory_space<vmem>>, %arg5: memref<1x256xf32, #tpu.memory_space<vmem>>, %arg6: memref<256x128xf32, #tpu.memory_space<vmem>>, %arg7: memref<1x128xf32, #tpu.memory_space<vmem>>, %arg8: memref<8x128xf32, #tpu.memory_space<vmem>>) attributes {dimension_semantics = [], scalar_prefetch = 0 : i64, scratch_operands = 0 : i64, tpu.core_type = #tpu.core_type<tc>} {
    %c0 = arith.constant 0 : index
    %c0_0 = arith.constant 0 : index
    %0 = vector.load %arg0[%c0, %c0_0] : memref<8x16xf32, #tpu.memory_space<vmem>>, vector<8x16xf32>
    %c0_1 = arith.constant 0 : index
    %c0_2 = arith.constant 0 : index
    %1 = vector.load %arg1[%c0_1, %c0_2] : memref<16x128xf32, #tpu.memory_space<vmem>>, vector<16x128xf32>
    %cst = arith.constant dense<0.000000e+00> : vector<8x128xf32>
    %2 = tpu.matmul %0, %1, %cst {dimension_numbers = #tpu.dot_dimension_numbers<[1], [0], [0], [1], [0, 0, 1, 1], [], []>} : vector<8x16xf32>, vector<16x128xf32>, vector<8x128xf32> -> vector<8x128xf32>
    %3 = vector.shape_cast %2 : vector<8x128xf32> to vector<1x8x128xf32>
    %cst_3 = arith.constant dense<0.000000e+00> : vector<1x128xf32>
    %4 = vector.multi_reduction <add>, %3, %cst_3 [1] : vector<1x8x128xf32> to vector<1x128xf32>
    %5 = vector.shape_cast %4 : vector<1x128xf32> to vector<1x1x128xf32>
    %cst_4 = arith.constant 1.250000e-01 : f32
    %6 = vector.broadcast %cst_4 : f32 to vector<1x1x128xf32>
    %7 = arith.mulf %5, %6 : vector<1x1x128xf32>
    %8 = arith.mulf %3, %3 : vector<1x8x128xf32>
    %cst_5 = arith.constant dense<0.000000e+00> : vector<1x128xf32>
    %9 = vector.multi_reduction <add>, %8, %cst_5 [1] : vector<1x8x128xf32> to vector<1x128xf32>
    %10 = vector.shape_cast %9 : vector<1x128xf32> to vector<1x1x128xf32>
    %cst_6 = arith.constant 1.250000e-01 : f32
    %11 = vector.broadcast %cst_6 : f32 to vector<1x1x128xf32>
    %12 = arith.mulf %10, %11 : vector<1x1x128xf32>
    %13 = arith.mulf %7, %7 : vector<1x1x128xf32>
    %14 = arith.subf %12, %13 : vector<1x1x128xf32>
    %c0_7 = arith.constant 0 : index
    %c0_8 = arith.constant 0 : index
    %15 = vector.load %arg2[%c0_7, %c0_8] : memref<1x128xf32, #tpu.memory_space<vmem>>, vector<1x128xf32>
    %cst_9 = arith.constant 9.99999974E-6 : f32
    %16 = vector.broadcast %cst_9 : f32 to vector<1x1x128xf32>
    %17 = arith.addf %14, %16 : vector<1x1x128xf32>
    %18 = math.rsqrt %17 : vector<1x1x128xf32>
    %19 = vector.shape_cast %15 : vector<1x128xf32> to vector<1x1x128xf32>
    %20 = arith.mulf %19, %18 : vector<1x1x128xf32>
    %c0_10 = arith.constant 0 : index
    %c0_11 = arith.constant 0 : index
    %21 = vector.load %arg3[%c0_10, %c0_11] : memref<1x128xf32, #tpu.memory_space<vmem>>, vector<1x128xf32>
    %22 = arith.mulf %7, %20 : vector<1x1x128xf32>
    %23 = vector.shape_cast %21 : vector<1x128xf32> to vector<1x1x128xf32>
    %24 = arith.subf %23, %22 : vector<1x1x128xf32>
    %25 = vector.broadcast %20 : vector<1x1x128xf32> to vector<1x8x128xf32>
    %26 = arith.mulf %3, %25 : vector<1x8x128xf32>
    %27 = vector.broadcast %24 : vector<1x1x128xf32> to vector<1x8x128xf32>
    %28 = arith.addf %26, %27 : vector<1x8x128xf32>
    %cst_12 = arith.constant 0.000000e+00 : f32
    %29 = vector.broadcast %cst_12 : f32 to vector<1x8x128xf32>
    %30 = arith.maximumf %28, %29 : vector<1x8x128xf32>
    %31 = vector.shape_cast %30 : vector<1x8x128xf32> to vector<8x128xf32>
    %c0_13 = arith.constant 0 : index
    %c0_14 = arith.constant 0 : index
    %32 = vector.load %arg4[%c0_13, %c0_14] : memref<128x256xf32, #tpu.memory_space<vmem>>, vector<128x256xf32>
    %cst_15 = arith.constant dense<0.000000e+00> : vector<8x256xf32>
    %33 = tpu.matmul %31, %32, %cst_15 {dimension_numbers = #tpu.dot_dimension_numbers<[1], [0], [0], [1], [0, 0, 1, 1], [], []>} : vector<8x128xf32>, vector<128x256xf32>, vector<8x256xf32> -> vector<8x256xf32>
    %c0_16 = arith.constant 0 : index
    %c0_17 = arith.constant 0 : index
    %34 = vector.load %arg5[%c0_16, %c0_17] : memref<1x256xf32, #tpu.memory_space<vmem>>, vector<1x256xf32>
    %35 = vector.broadcast %34 : vector<1x256xf32> to vector<8x256xf32>
    %36 = arith.addf %33, %35 : vector<8x256xf32>
    %cst_18 = arith.constant 0.000000e+00 : f32
    %37 = vector.broadcast %cst_18 : f32 to vector<8x256xf32>
    %38 = arith.maximumf %36, %37 : vector<8x256xf32>
    %c0_19 = arith.constant 0 : index
    %c0_20 = arith.constant 0 : index
    %39 = vector.load %arg6[%c0_19, %c0_20] : memref<256x128xf32, #tpu.memory_space<vmem>>, vector<256x128xf32>
    %cst_21 = arith.constant dense<0.000000e+00> : vector<8x128xf32>
    %40 = tpu.matmul %38, %39, %cst_21 {dimension_numbers = #tpu.dot_dimension_numbers<[1], [0], [0], [1], [0, 0, 1, 1], [], []>} : vector<8x256xf32>, vector<256x128xf32>, vector<8x128xf32> -> vector<8x128xf32>
    %c0_22 = arith.constant 0 : index
    %c0_23 = arith.constant 0 : index
    %41 = vector.load %arg7[%c0_22, %c0_23] : memref<1x128xf32, #tpu.memory_space<vmem>>, vector<1x128xf32>
    %42 = vector.broadcast %41 : vector<1x128xf32> to vector<8x128xf32>
    %43 = arith.addf %40, %42 : vector<8x128xf32>
    %44 = math.tanh %43 : vector<8x128xf32>
    %c0_24 = arith.constant 0 : index
    %c0_25 = arith.constant 0 : index
    %45 = vector.load %arg8[%c0_24, %c0_25] : memref<8x128xf32, #tpu.memory_space<vmem>>, vector<8x128xf32>
    tpu.vector_store %arg8[%c0_24, %c0_25], %44 {strides = array<i32>} : memref<8x128xf32, #tpu.memory_space<vmem>>, vector<8x128xf32>,
    return
  }
}

</mosaic_0001>

<llo_original>
// kernel: tpu_custom_call.1
$region0: #{tpu_custom_call.1}
  #allocation0 [shape = 'u32[]', space=smem, size = 0x4, offset = 0x4, fixed_abs, tag = 'smem constant byte address 0x4 - core index']
  #allocation1 [shape = 'u32[144,128]{1,0:T(1,128)}', space=vmem, size = 0x12000, scoped, tag = 'internal scratch']
  %s0 = inlined_call_operand.hbm [shape: f32[8,16], index: 0, kind: input, shape index: {}]
  %s1 = inlined_call_operand.hbm [shape: f32[16,128], index: 1, kind: input, shape index: {}]
  %s2 = inlined_call_operand.vmem [shape: f32[1,128], index: 2, kind: input, shape index: {}]
  %s3 = inlined_call_operand.vmem [shape: f32[1,128], index: 3, kind: input, shape index: {}]
  %s4 = inlined_call_operand.hbm [shape: f32[128,256], index: 4, kind: input, shape index: {}]
  %s5 = inlined_call_operand.vmem [shape: f32[1,256], index: 5, kind: input, shape index: {}]
  %s6 = inlined_call_operand.hbm [shape: f32[256,128], index: 6, kind: input, shape index: {}]
  %s7 = inlined_call_operand.vmem [shape: f32[1,128], index: 7, kind: input, shape index: {}]
  %s8 = inlined_call_operand.hbm [shape: f32[8,128], index: 8, kind: output, shape index: {}]
  %s9 = sld [smem:[#allocation0]]
  $region58: #{tpu_custom_call.1} parent=0
    _
  %s11 = ssub.s32 1, %s9
  %s12 = scalar_select 0, %s11, %s9
  $region1: #{tpu_custom_call.1} parent=0
    #allocation2 [shape = 'u8[4096]{0}', space=vmem, size = 0x1000, scoped, tag = 'input window, operand 0, single buffered']
    #allocation3 [shape = 's32[1]{0}', space=sflag, size = 0x4, scoped, tag = 'scoped memory for tpu_custom_call.1']
    #allocation4 [shape = 's32[1]{0}', space=sflag, size = 0x4, scoped, tag = 'scoped memory for tpu_custom_call.1']
    #allocation5 [shape = 'u8[8192]{0}', space=vmem, size = 0x2000, scoped, tag = 'input window, operand 1, single buffered']
    #allocation6 [shape = 's32[1]{0}', space=sflag, size = 0x4, scoped, tag = 'scoped memory for tpu_custom_call.1']
    #allocation7 [shape = 'u8[131072]{0}', space=vmem, size = 0x20000, scoped, tag = 'input window, operand 4, single buffered']
    #allocation8 [shape = 'u8[131072]{0}', space=vmem, size = 0x20000, scoped, tag = 'input window, operand 6, single buffered']
    #allocation9 [shape = 's32[1]{0}', space=sflag, size = 0x4, scoped, tag = 'scoped memory for tpu_custom_call.1']
    #allocation10 [shape = 'u8[4096]{0}', space=vmem, size = 0x1000, scoped, tag = 'output window, operand 0, single buffered']
    %13 = vsyncpa [#allocation3], 0
    %14 = vsyncpa [#allocation6], 0
    %15 = vsyncpa [#allocation9], 0
    %16 = vsyncpa [#allocation4], 0
    // Predicated region
    $region2: #{tpu_custom_call.1} parent=1 // pred_check
      _
    $region3: #{tpu_custom_call.1} parent=1 // pred_check_branch
      %18 = sbr.rel (0) target = $region5
    $region4: #{tpu_custom_call.1} parent=1 // pred_region
      %s20 = ssub.s32 128, 128
      %21 = vsyncadd [#allocation3], %s20
      %s23 = sshll.u32 [#allocation2], 4
      %s24 = int_to_ptr.vmem [resolvable:$true] %s23
      %26 = dma.hbm_to_vmem [thread:$0]  %s0, 128, %s24, [#allocation3]
    $region5: #{tpu_custom_call.1} parent=1 // pred_fallthru
      _
    // Predicated region
    $region6: #{tpu_custom_call.1} parent=1 // pred_check
      _
    $region7: #{tpu_custom_call.1} parent=1 // pred_check_branch
      %28 = sbr.rel (0) target = $region9
    $region8: #{tpu_custom_call.1} parent=1 // pred_region
      %s30 = ssub.s32 256, 256
      %31 = vsyncadd [#allocation6], %s30
      %s32 = sshll.u32 [#allocation5], 4
      %s33 = int_to_ptr.vmem [resolvable:$true] %s32
      %38 = dma.hbm_to_vmem [thread:$0]  %s1, 256, %s33, [#allocation6], 128, 128, 8
    $region9: #{tpu_custom_call.1} parent=1 // pred_fallthru
      _
    // Predicated region
    $region10: #{tpu_custom_call.1} parent=1 // pred_check
      _
    $region11: #{tpu_custom_call.1} parent=1 // pred_check_branch
      %40 = sbr.rel (0) target = $region13
    $region12: #{tpu_custom_call.1} parent=1 // pred_region
      _
    $region13: #{tpu_custom_call.1} parent=1 // pred_fallthru
      _
    // Predicated region
    $region14: #{tpu_custom_call.1} parent=1 // pred_check
      _
    $region15: #{tpu_custom_call.1} parent=1 // pred_check_branch
      %42 = sbr.rel (0) target = $region17
    $region16: #{tpu_custom_call.1} parent=1 // pred_region
      _
    $region17: #{tpu_custom_call.1} parent=1 // pred_fallthru
      _
    // Predicated region
    $region18: #{tpu_custom_call.1} parent=1 // pred_check
      _
    $region19: #{tpu_custom_call.1} parent=1 // pred_check_branch
      %44 = sbr.rel (0) target = $region21
    $region20: #{tpu_custom_call.1} parent=1 // pred_region
      %s46 = ssub.s32 4096, 4096
      %47 = vsyncadd [#allocation6], %s46
      %s48 = sshll.u32 [#allocation7], 4
      %s49 = int_to_ptr.vmem [resolvable:$true] %s48
      %54 = dma.hbm_to_vmem [thread:$0]  %s4, 4096, %s49, [#allocation6], 256, 256, 16
    $region21: #{tpu_custom_call.1} parent=1 // pred_fallthru
      _
    // Predicated region
    $region22: #{tpu_custom_call.1} parent=1 // pred_check
      _
    $region23: #{tpu_custom_call.1} parent=1 // pred_check_branch
      %56 = sbr.rel (0) target = $region25
    $region24: #{tpu_custom_call.1} parent=1 // pred_region
      _
    $region25: #{tpu_custom_call.1} parent=1 // pred_fallthru
      _
    // Predicated region
    $region26: #{tpu_custom_call.1} parent=1 // pred_check
      _
    $region27: #{tpu_custom_call.1} parent=1 // pred_check_branch
      %58 = sbr.rel (0) target = $region29
    $region28: #{tpu_custom_call.1} parent=1 // pred_region
      %s60 = ssub.s32 4096, 4096
      %61 = vsyncadd [#allocation9], %s60
      %s62 = sshll.u32 [#allocation8], 4
      %s63 = int_to_ptr.vmem [resolvable:$true] %s62
      %68 = dma.hbm_to_vmem [thread:$0]  %s6, 4096, %s63, [#allocation9], 128, 128, 8
    $region29: #{tpu_custom_call.1} parent=1 // pred_fallthru
      _
    // Predicated region
    $region30: #{tpu_custom_call.1} parent=1 // pred_check
      _
    $region31: #{tpu_custom_call.1} parent=1 // pred_check_branch
      %70 = sbr.rel (0) target = $region33
    $region32: #{tpu_custom_call.1} parent=1 // pred_region
      _
    $region33: #{tpu_custom_call.1} parent=1 // pred_fallthru
      _
    // Predicated region
    $region34: #{tpu_custom_call.1} parent=1 // pred_check
      _
    $region35: #{tpu_custom_call.1} parent=1 // pred_check_branch
      %72 = sbr.rel (0) target = $region37
    $region36: #{tpu_custom_call.1} parent=1 // pred_region
      %73 = dma.done [#allocation3], 128
    $region37: #{tpu_custom_call.1} parent=1 // pred_fallthru
      _
    // Predicated region
    $region38: #{tpu_custom_call.1} parent=1 // pred_check
      _
    $region39: #{tpu_custom_call.1} parent=1 // pred_check_branch
      %75 = sbr.rel (0) target = $region41
    $region40: #{tpu_custom_call.1} parent=1 // pred_region
      %76 = dma.done [#allocation6], 256
    $region41: #{tpu_custom_call.1} parent=1 // pred_fallthru
      _
    // Predicated region
    $region42: #{tpu_custom_call.1} parent=1 // pred_check
      _
    $region43: #{tpu_custom_call.1} parent=1 // pred_check_branch
      %78 = sbr.rel (0) target = $region45
    $region44: #{tpu_custom_call.1} parent=1 // pred_region
      %79 = dma.done [#allocation6], 4096
    $region45: #{tpu_custom_call.1} parent=1 // pred_fallthru
      _
    // Predicated region
    $region46: #{tpu_custom_call.1} parent=1 // pred_check
      _
    $region47: #{tpu_custom_call.1} parent=1 // pred_check_branch
      %81 = sbr.rel (0) target = $region49
    $region48: #{tpu_custom_call.1} parent=1 // pred_region
      %82 = dma.done [#allocation9], 4096
    $region49: #{tpu_custom_call.1} parent=1 // pred_fallthru
      _
    %v83 = vld [vmem:[#allocation2] sm:$0xff]
    %v84 = vld [vmem:[#allocation5] sm:$0xff]
    %v85 = vld [vmem:[#allocation5 + $0x8] sm:$0xff]
    %vm86 = vcmask 130048
    %v88 = vsel %vm86, %v83, 0
    %90 = vmatprep.subr.mxu0 0.0
    %91 = vmatpush1.msra.mxu0 %v84
    %92 = vmatprep.subr.mxu0 0.0
    %93 = vmatpush1.msra.mxu0 %v85
    %94 = vmatprep.subr.mxu0 0.0
    %95 = vmatpush1.msra.mxu0 0.0
    %96 = vmatprep.subr.mxu0 0.0
    %97 = vmatpush1.msra.mxu0 0.0
    %98 = vmatprep.subr.mxu0 0.0
    %99 = vmatpush1.msra.mxu0 0.0
    %100 = vmatprep.subr.mxu0 0.0
    %101 = vmatpush1.msra.mxu0 0.0
    %102 = vmatprep.subr.mxu0 0.0
    %103 = vmatpush1.msra.mxu0 0.0
    %104 = vmatprep.subr.mxu0 0.0
    %105 = vmatpush1.msra.mxu0 0.0
    %106 = vmatprep.subr.mxu0 0.0
    %107 = vmatpush1.msra.mxu0 0.0
    %108 = vmatprep.subr.mxu0 0.0
    %109 = vmatpush1.msra.mxu0 0.0
    %110 = vmatprep.subr.mxu0 0.0
    %111 = vmatpush1.msra.mxu0 0.0
    %112 = vmatprep.subr.mxu0 0.0
    %113 = vmatpush1.msra.mxu0 0.0
    %114 = vmatprep.subr.mxu0 0.0
    %115 = vmatpush1.msra.mxu0 0.0
    %116 = vmatprep.subr.mxu0 0.0
    %117 = vmatpush1.msra.mxu0 0.0
    %118 = vmatprep.subr.mxu0 0.0
    %119 = vmatpush1.msra.mxu0 0.0
    %120 = vmatprep.subr.mxu0 0.0
    %121 = vmatpush1.msra.mxu0 0.0
    %122 = vmatprep.subr.mxu0 0.0
    %123 = vmatpush1.msra.mxu0 0.0
    %124 = vmatprep.subr.mxu0 0.0
    %125 = vmatpush1.msra.mxu0 0.0
    %126 = vmatprep.subr.mxu0 0.0
    %127 = vmatpush1.msra.mxu0 0.0
    %128 = vmatprep.subr.mxu0 0.0
    %129 = vmatpush1.msra.mxu0 0.0
    %130 = vmatprep.subr.mxu0 0.0
    %131 = vmatpush1.msra.mxu0 0.0
    %132 = vmatprep.subr.mxu0 0.0
    %133 = vmatpush1.msra.mxu0 0.0
    %134 = vmatprep.subr.mxu0 0.0
    %135 = vmatpush1.msra.mxu0 0.0
    %136 = vmatprep.subr.mxu0 0.0
    %137 = vmatpush1.msra.mxu0 0.0
    %138 = vmatprep.subr.mxu0 0.0
    %139 = vmatpush1.msra.mxu0 0.0
    %140 = vmatprep.subr.mxu0 0.0
    %141 = vmatpush1.msra.mxu0 0.0
    %142 = vmatprep.subr.mxu0 0.0
    %143 = vmatpush1.msra.mxu0 0.0
    %144 = vmatprep.subr.mxu0 0.0
    %145 = vmatpush1.msra.mxu0 0.0
    %146 = vmatprep.subr.mxu0 0.0
    %147 = vmatpush1.msra.mxu0 0.0
    %148 = vmatprep.subr.mxu0 0.0
    %149 = vmatpush1.msra.mxu0 0.0
    %150 = vmatprep.subr.mxu0 0.0
    %151 = vmatpush1.msra.mxu0 0.0
    %152 = vmatprep.subr.mxu0 0.0
    %153 = vmatpush1.msra.mxu0 0.0
    %154 = vmatprep.mubr.f32.mxu0 0.0
    %155 = vmatmul.mubr.f32.gmra.mrb[0].mxu0 %v88
    %v156 = vpop.f32.mrb[0].mxu0
    %v157 = vadd.f32 0.0, %v156
    %v158 = vpop.f32.mrb[0].mxu0
    %159 = vdwg.mxu0
    %v160 = vrot.slane %v157, 4
    %v161 = vadd.f32 %v157, %v160
    %v162 = vrot.slane %v161, 2
    %v163 = vadd.f32 %v161, %v162
    %v164 = vrot.slane %v163, 1
    %v165 = vadd.f32 %v163, %v164
    %v166 = vmul.f32 %v165, 0.125
    %v167 = vmul.f32 %v157, %v157
    %v168 = vrot.slane %v167, 4
    %v169 = vadd.f32 %v167, %v168
    %v170 = vrot.slane %v169, 2
    %v171 = vadd.f32 %v169, %v170
    %v172 = vrot.slane %v171, 1
    %v173 = vadd.f32 %v171, %v172
    %v174 = vmul.f32 %v173, 0.125
    %v175 = vmul.f32 %v166, %v166
    %v176 = vsub.f32 %v174, %v175
    %v177 = vld [vmem:[%s2] sm:$0x1]
    %v178 = vadd.f32 %v176, 1e-05
    %v179 = vrsqrt.pop %v178
    %v180 = vmul.f32 %v177, %v179
    %v181 = vld [vmem:[%s3] sm:$0x1]
    %v182 = vmul.f32 %v166, %v180
    %v183 = vsub.f32 %v181, %v182
    %v185 = vlaneseq
    %v186 = vshrl.u32 %v185, 7
    %v187 = vsub.s32 0, %v186
    %v188 = vrot.slane %v180, %v187
    %v190 = vmul.f32 %v157, %v188
    %v192 = vlaneseq
    %v193 = vshrl.u32 %v192, 7
    %v194 = vsub.s32 0, %v193
    %v195 = vrot.slane %v183, %v194
    %v197 = vadd.f32 %v190, %v195
    %v198 = vmax.f32 %v197, 0.0
    %v199 = vld [vmem:[#allocation7] sm:$0xff]
    %v200 = vld [vmem:[#allocation7 + $0x8] sm:$0xff]
    %v201 = vld [vmem:[#allocation7 + $0x10] sm:$0xff]
    %v202 = vld [vmem:[#allocation7 + $0x18] sm:$0xff]
    %v203 = vld [vmem:[#allocation7 + $0x20] sm:$0xff]
    %v204 = vld [vmem:[#allocation7 + $0x28] sm:$0xff]
    %v205 = vld [vmem:[#allocation7 + $0x30] sm:$0xff]
    %v206 = vld [vmem:[#allocation7 + $0x38] sm:$0xff]
    %v207 = vld [vmem:[#allocation7 + $0x40] sm:$0xff]
    %v208 = vld [vmem:[#allocation7 + $0x48] sm:$0xff]
    %v209 = vld [vmem:[#allocation7 + $0x50] sm:$0xff]
    %v210 = vld [vmem:[#allocation7 + $0x58] sm:$0xff]
    %v211 = vld [vmem:[#allocation7 + $0x60] sm:$0xff]
    %v212 = vld [vmem:[#allocation7 + $0x68] sm:$0xff]
    %v213 = vld [vmem:[#allocation7 + $0x70] sm:$0xff]
    %v214 = vld [vmem:[#allocation7 + $0x78] sm:$0xff]
    %v215 = vld [vmem:[#allocation7 + $0x80] sm:$0xff]
    %v216 = vld [vmem:[#allocation7 + $0x88] sm:$0xff]
    %v217 = vld [vmem:[#allocation7 + $0x90] sm:$0xff]
    %v218 = vld [vmem:[#allocation7 + $0x98] sm:$0xff]
    %v219 = vld [vmem:[#allocation7 + $0xa0] sm:$0xff]
    %v220 = vld [vmem:[#allocation7 + $0xa8] sm:$0xff]
    %v221 = vld [vmem:[#allocation7 + $0xb0] sm:$0xff]
    %v222 = vld [vmem:[#allocation7 + $0xb8] sm:$0xff]
    %v223 = vld [vmem:[#allocation7 + $0xc0] sm:$0xff]
    %v224 = vld [vmem:[#allocation7 + $0xc8] sm:$0xff]
    %v225 = vld [vmem:[#allocation7 + $0xd0] sm:$0xff]
    %v226 = vld [vmem:[#allocation7 + $0xd8] sm:$0xff]
    %v227 = vld [vmem:[#allocation7 + $0xe0] sm:$0xff]
    %v228 = vld [vmem:[#allocation7 + $0xe8] sm:$0xff]
    %v229 = vld [vmem:[#allocation7 + $0xf0] sm:$0xff]
    %v230 = vld [vmem:[#allocation7 + $0xf8] sm:$0xff]
    %v231 = vld [vmem:[%s5] sm:$0x3]
    %v233 = vlaneseq
    %v234 = vshrl.u32 %v233, 7
    %v235 = vsub.s32 0, %v234
    %v236 = vrot.slane %v231, %v235
    %v237 = vlaneseq
    %v238 = vshrl.u32 %v237, 7
    %v239 = vsub.s32 1, %v238
    %v240 = vrot.slane %v231, %v239
    %243 = vmatprep.subr.mxu0 %v200
    %244 = vmatpush1.msra.mxu0 %v199
    %245 = vmatprep.subr.mxu0 %v202
    %246 = vmatpush1.msra.mxu0 %v201
    %247 = vmatprep.subr.mxu0 %v204
    %248 = vmatpush1.msra.mxu0 %v203
    %249 = vmatprep.subr.mxu0 %v206
    %250 = vmatpush1.msra.mxu0 %v205
    %251 = vmatprep.subr.mxu0 %v208
    %252 = vmatpush1.msra.mxu0 %v207
    %253 = vmatprep.subr.mxu0 %v210
    %254 = vmatpush1.msra.mxu0 %v209
    %255 = vmatprep.subr.mxu0 %v212
    %256 = vmatpush1.msra.mxu0 %v211
    %257 = vmatprep.subr.mxu0 %v214
    %258 = vmatpush1.msra.mxu0 %v213
    %259 = vmatprep.subr.mxu0 %v216
    %260 = vmatpush1.msra.mxu0 %v215
    %261 = vmatprep.subr.mxu0 %v218
    %262 = vmatpush1.msra.mxu0 %v217
    %263 = vmatprep.subr.mxu0 %v220
    %264 = vmatpush1.msra.mxu0 %v219
    %265 = vmatprep.subr.mxu0 %v222
    %266 = vmatpush1.msra.mxu0 %v221
    %267 = vmatprep.subr.mxu0 %v224
    %268 = vmatpush1.msra.mxu0 %v223
    %269 = vmatprep.subr.mxu0 %v226
    %270 = vmatpush1.msra.mxu0 %v225
    %271 = vmatprep.subr.mxu0 %v228
    %272 = vmatpush1.msra.mxu0 %v227
    %273 = vmatprep.subr.mxu0 %v230
    %274 = vmatpush1.msra.mxu0 %v229
    %275 = vmatprep.subr.mxu0 0.0
    %276 = vmatpush1.msra.mxu0 0.0
    %277 = vmatprep.subr.mxu0 0.0
    %278 = vmatpush1.msra.mxu0 0.0
    %279 = vmatprep.subr.mxu0 0.0
    %280 = vmatpush1.msra.mxu0 0.0
    %281 = vmatprep.subr.mxu0 0.0
    %282 = vmatpush1.msra.mxu0 0.0
    %283 = vmatprep.subr.mxu0 0.0
    %284 = vmatpush1.msra.mxu0 0.0
    %285 = vmatprep.subr.mxu0 0.0
    %286 = vmatpush1.msra.mxu0 0.0
    %287 = vmatprep.subr.mxu0 0.0
    %288 = vmatpush1.msra.mxu0 0.0
    %289 = vmatprep.subr.mxu0 0.0
    %290 = vmatpush1.msra.mxu0 0.0
    %291 = vmatprep.subr.mxu0 0.0
    %292 = vmatpush1.msra.mxu0 0.0
    %293 = vmatprep.subr.mxu0 0.0
    %294 = vmatpush1.msra.mxu0 0.0
    %295 = vmatprep.subr.mxu0 0.0
    %296 = vmatpush1.msra.mxu0 0.0
    %297 = vmatprep.subr.mxu0 0.0
    %298 = vmatpush1.msra.mxu0 0.0
    %299 = vmatprep.subr.mxu0 0.0
    %300 = vmatpush1.msra.mxu0 0.0
    %301 = vmatprep.subr.mxu0 0.0
    %302 = vmatpush1.msra.mxu0 0.0
    %303 = vmatprep.subr.mxu0 0.0
    %304 = vmatpush1.msra.mxu0 0.0
    %305 = vmatprep.subr.mxu0 0.0
    %306 = vmatpush1.msra.mxu0 0.0
    %307 = vmatprep.mubr.f32.mxu0 0.0
    %308 = vmatmul.mubr.f32.gmra.mrb[0].mxu0 %v198
    %v309 = vpop.f32.mrb[0].mxu0
    %v310 = vadd.f32 %v236, %v309
    %v311 = vpop.f32.mrb[0].mxu0
    %v312 = vadd.f32 %v240, %v311
    %313 = vdwg.mxu0
    %v314 = vmax.f32 %v310, 0.0
    %v315 = vmax.f32 %v312, 0.0
    %v316 = vld [vmem:[#allocation8] sm:$0xff]
    %v317 = vld [vmem:[#allocation8 + $0x8] sm:$0xff]
    %v318 = vld [vmem:[#allocation8 + $0x10] sm:$0xff]
    %v319 = vld [vmem:[#allocation8 + $0x18] sm:$0xff]
    %v320 = vld [vmem:[#allocation8 + $0x20] sm:$0xff]
    %v321 = vld [vmem:[#allocation8 + $0x28] sm:$0xff]
    %v322 = vld [vmem:[#allocation8 + $0x30] sm:$0xff]
    %v323 = vld [vmem:[#allocation8 + $0x38] sm:$0xff]
    %v324 = vld [vmem:[#allocation8 + $0x40] sm:$0xff]
    %v325 = vld [vmem:[#allocation8 + $0x48] sm:$0xff]
    %v326 = vld [vmem:[#allocation8 + $0x50] sm:$0xff]
    %v327 = vld [vmem:[#allocation8 + $0x58] sm:$0xff]
    %v328 = vld [vmem:[#allocation8 + $0x60] sm:$0xff]
    %v329 = vld [vmem:[#allocation8 + $0x68] sm:$0xff]
    %v330 = vld [vmem:[#allocation8 + $0x70] sm:$0xff]
    %v331 = vld [vmem:[#allocation8 + $0x78] sm:$0xff]
    %v332 = vld [vmem:[#allocation8 + $0x80] sm:$0xff]
    %v333 = vld [vmem:[#allocation8 + $0x88] sm:$0xff]
    %v334 = vld [vmem:[#allocation8 + $0x90] sm:$0xff]
    %v335 = vld [vmem:[#allocation8 + $0x98] sm:$0xff]
    %v336 = vld [vmem:[#allocation8 + $0xa0] sm:$0xff]
    %v337 = vld [vmem:[#allocation8 + $0xa8] sm:$0xff]
    %v338 = vld [vmem:[#allocation8 + $0xb0] sm:$0xff]
    %v339 = vld [vmem:[#allocation8 + $0xb8] sm:$0xff]
    %v340 = vld [vmem:[#allocation8 + $0xc0] sm:$0xff]
    %v341 = vld [vmem:[#allocation8 + $0xc8] sm:$0xff]
    %v342 = vld [vmem:[#allocation8 + $0xd0] sm:$0xff]
    %v343 = vld [vmem:[#allocation8 + $0xd8] sm:$0xff]
    %v344 = vld [vmem:[#allocation8 + $0xe0] sm:$0xff]
    %v345 = vld [vmem:[#allocation8 + $0xe8] sm:$0xff]
    %v346 = vld [vmem:[#allocation8 + $0xf0] sm:$0xff]
    %v347 = vld [vmem:[#allocation8 + $0xf8] sm:$0xff]
    %v348 = vld [vmem:[%s7] sm:$0x1]
    %v350 = vlaneseq
    %v351 = vshrl.u32 %v350, 7
    %v352 = vsub.s32 0, %v351
    %v353 = vrot.slane %v348, %v352
    %355 = vmatprep.subr.mxu0 0.0
    %356 = vmatpush1.msra.mxu0 %v316
    %357 = vmatprep.subr.mxu0 0.0
    %358 = vmatpush1.msra.mxu0 %v317
    %359 = vmatprep.subr.mxu0 0.0
    %360 = vmatpush1.msra.mxu0 %v318
    %361 = vmatprep.subr.mxu0 0.0
    %362 = vmatpush1.msra.mxu0 %v319
    %363 = vmatprep.subr.mxu0 0.0
    %364 = vmatpush1.msra.mxu0 %v320
    %365 = vmatprep.subr.mxu0 0.0
    %366 = vmatpush1.msra.mxu0 %v321
    %367 = vmatprep.subr.mxu0 0.0
    %368 = vmatpush1.msra.mxu0 %v322
    %369 = vmatprep.subr.mxu0 0.0
    %370 = vmatpush1.msra.mxu0 %v323
    %371 = vmatprep.subr.mxu0 0.0
    %372 = vmatpush1.msra.mxu0 %v324
    %373 = vmatprep.subr.mxu0 0.0
    %374 = vmatpush1.msra.mxu0 %v325
    %375 = vmatprep.subr.mxu0 0.0
    %376 = vmatpush1.msra.mxu0 %v326
    %377 = vmatprep.subr.mxu0 0.0
    %378 = vmatpush1.msra.mxu0 %v327
    %379 = vmatprep.subr.mxu0 0.0
    %380 = vmatpush1.msra.mxu0 %v328
    %381 = vmatprep.subr.mxu0 0.0
    %382 = vmatpush1.msra.mxu0 %v329
    %383 = vmatprep.subr.mxu0 0.0
    %384 = vmatpush1.msra.mxu0 %v330
    %385 = vmatprep.subr.mxu0 0.0
    %386 = vmatpush1.msra.mxu0 %v331
    %387 = vmatprep.subr.mxu0 0.0
    %388 = vmatpush1.msra.mxu0 %v332
    %389 = vmatprep.subr.mxu0 0.0
    %390 = vmatpush1.msra.mxu0 %v333
    %391 = vmatprep.subr.mxu0 0.0
    %392 = vmatpush1.msra.mxu0 %v334
    %393 = vmatprep.subr.mxu0 0.0
    %394 = vmatpush1.msra.mxu0 %v335
    %395 = vmatprep.subr.mxu0 0.0
    %396 = vmatpush1.msra.mxu0 %v336
    %397 = vmatprep.subr.mxu0 0.0
    %398 = vmatpush1.msra.mxu0 %v337
    %399 = vmatprep.subr.mxu0 0.0
    %400 = vmatpush1.msra.mxu0 %v338
    %401 = vmatprep.subr.mxu0 0.0
    %402 = vmatpush1.msra.mxu0 %v339
    %403 = vmatprep.subr.mxu0 0.0
    %404 = vmatpush1.msra.mxu0 %v340
    %405 = vmatprep.subr.mxu0 0.0
    %406 = vmatpush1.msra.mxu0 %v341
    %407 = vmatprep.subr.mxu0 0.0
    %408 = vmatpush1.msra.mxu0 %v342
    %409 = vmatprep.subr.mxu0 0.0
    %410 = vmatpush1.msra.mxu0 %v343
    %411 = vmatprep.subr.mxu0 0.0
    %412 = vmatpush1.msra.mxu0 %v344
    %413 = vmatprep.subr.mxu0 0.0
    %414 = vmatpush1.msra.mxu0 %v345
    %415 = vmatprep.subr.mxu0 0.0
    %416 = vmatpush1.msra.mxu0 %v346
    %417 = vmatprep.subr.mxu0 0.0
    %418 = vmatpush1.msra.mxu0 %v347
    %419 = vmatprep.mubr.f32.mxu0 %v315
    %420 = vmatmul.mubr.f32.gmra.mrb[0].mxu0 %v314
    %v421 = vpop.f32.mrb[0].mxu0
    %v422 = vadd.f32 %v353, %v421
    %v423 = vpop.f32.mrb[0].mxu0
    %424 = vdwg.mxu0
    %v425 = vtanh.pop %v422
    %426 = vst [vmem:[#allocation10] sm:$0xff] %v425
    // Predicated region
    $region50: #{tpu_custom_call.1} parent=1 // pred_check
      _
    $region51: #{tpu_custom_call.1} parent=1 // pred_check_branch
      %428 = sbr.rel (0) target = $region53
    $region52: #{tpu_custom_call.1} parent=1 // pred_region
      %s430 = ssub.s32 128, 128
      %431 = vsyncadd [#allocation4], %s430
      %s433 = sshll.u32 [#allocation10], 4
      %s434 = int_to_ptr.vmem [resolvable:$true] %s433
      %436 = dma.vmem_to_hbm [thread:$0]  %s434, 128, %s8, [#allocation4]
    $region53: #{tpu_custom_call.1} parent=1 // pred_fallthru
      _
    // Predicated region
    $region54: #{tpu_custom_call.1} parent=1 // pred_check
      _
    $region55: #{tpu_custom_call.1} parent=1 // pred_check_branch
      %438 = sbr.rel (0) target = $region57
    $region56: #{tpu_custom_call.1} parent=1 // pred_region
      %439 = dma.done [#allocation4], 128
    $region57: #{tpu_custom_call.1} parent=1 // pred_fallthru
      _
    %440 = vsyncpa [#allocation3], 1
    %441 = vsyncpa [#allocation6], 1
    %442 = vsyncpa [#allocation9], 1
    %443 = vsyncpa [#allocation4], 1

</llo_original>
